<compile_context>
chip_gen: v7x
topology: tpu7x:2x2x1
jax: 0.10.0
libtpu: 0.0.40
codegen_flags: <defaults>
</compile_context>

<pallas_src>
import functools

import jax
import jax.numpy as jnp
from jax import lax
from jax.experimental import pallas as pl
from jax.experimental.pallas import tpu as pltpu


# --------------------------------------------------------------------------
# Kernel 1: channel-attention (CAM) matrix.
# Accumulates energy[c, d] = sum_n x[c, n] x[d, n] over key tiles of N from a
# single x^T stream and emits the softmax'd channel attention (C, C).
# --------------------------------------------------------------------------
def cam_attention_kernel(xt_ref, attn_ref, energy_sc):
    k = pl.program_id(1)

    @pl.when(k == 0)
    def _init():
        energy_sc[...] = jnp.zeros_like(energy_sc)

    xt = xt_ref[...]                                        # (tk, C) f32
    # Gram accumulation contracting the sublane (key) axis of both operands
    # (lhs-transposed matmul).  f32 on purpose: entries are O(N) and feed exp.
    energy_sc[...] += lax.dot_general(
        xt, xt, dimension_numbers=(((0,), (0,)), ((), ())),
        preferred_element_type=jnp.float32)

    @pl.when(k == pl.num_programs(1) - 1)
    def _finalize():
        en = energy_sc[...]                                 # (C, C)
        # Reference: softmax_d(rowmax_c - energy[c, d])
        #          = exp(rowmin_c - energy[c, d]) / sum_d' exp(...)
        rmin = jnp.min(en, axis=-1, keepdims=True)          # (C, 1)
        p = jnp.exp(rmin - en)                              # (C, C)
        denom = jnp.sum(p, axis=-1, keepdims=True)          # (C, 1)
        attn_ref[...] = (p * pl.reciprocal(denom, approx=True)
                         ).astype(attn_ref.dtype)


# --------------------------------------------------------------------------
# Kernel 2: flash-tiled PAM + CAM apply + both residuals.
# Grid = (B, query tiles of N, key tiles of N); key axis is the reduction.
# Everything is kept in (C, tq)/(tk, tq) "transposed" layout so the output is
# written directly in (B, C, N) -- no wrapper-side transpose afterwards.
# --------------------------------------------------------------------------
def danet_main_kernel(x_q_ref, xt_kv_ref, v_kv_ref, attn_c_ref, m2t_ref,
                      r_ref, gp_ref, gc_ref, out_ref,
                      qm_sc, m_sc, l_sc, acc_sc, *, use_bf16_exp):
    kj = pl.program_id(2)

    @pl.when(kj == 0)
    def _init():
        # Query-side projection for this query tile (transposed layout):
        #   qm[c', i] = sum_c (Wk^T Wq)[c', c] x[c, i] + (Wk^T bq)[c']
        qm = jnp.dot(m2t_ref[...], x_q_ref[...].astype(jnp.bfloat16),
                     preferred_element_type=jnp.float32) + r_ref[...]
        qm_sc[...] = qm.astype(jnp.bfloat16)
        m_sc[...] = jnp.full_like(m_sc, -jnp.inf)
        l_sc[...] = jnp.zeros_like(l_sc)
        acc_sc[...] = jnp.zeros_like(acc_sc)

    # Transposed energy tile e[j, i] = k_j . q_i (per-query-row constants of
    # the reference energy cancel in the softmax over j).  Contraction over C.
    e = jnp.dot(xt_kv_ref[...], qm_sc[...], preferred_element_type=jnp.float32)

    # Online softmax over the key (sublane) axis.
    m_prev = m_sc[...]                                      # (1, tq)
    m_new = jnp.maximum(m_prev, jnp.max(e, axis=0, keepdims=True))
    alpha = jnp.exp(m_prev - m_new)
    if use_bf16_exp:
        # v6e/v7x: bf16 EUP exp; row-sum still accumulated in f32.
        p = jnp.exp((e - m_new).astype(jnp.bfloat16))       # (tk, tq) bf16
        p_sum = jnp.sum(p.astype(jnp.float32), axis=0, keepdims=True)
    else:
        p_f32 = jnp.exp(e - m_new)
        p_sum = jnp.sum(p_f32, axis=0, keepdims=True)
        p = p_f32.astype(jnp.bfloat16)
    l_sc[...] = alpha * l_sc[...] + p_sum
    acc_sc[...] = alpha * acc_sc[...] + jnp.dot(
        v_kv_ref[...], p, preferred_element_type=jnp.float32)
    m_sc[...] = m_new

    @pl.when(kj == pl.num_programs(2) - 1)
    def _finalize():
        x_q = x_q_ref[...]                                  # (C, tq) f32
        pam = acc_sc[...] * pl.reciprocal(l_sc[...], approx=True)
        # CAM apply: cam[c, i] = sum_d attn[c, d] x[d, i]
        cam = jnp.dot(attn_c_ref[...], x_q.astype(jnp.bfloat16),
                      preferred_element_type=jnp.float32)
        # DANet output = (gamma_c*cam + x) + (gamma_p*pam + x)
        out = gc_ref[0] * cam + gp_ref[0] * pam + 2.0 * x_q
        out_ref[...] = out.astype(out_ref.dtype)


# --------------------------------------------------------------------------
# Wrapper helpers
# --------------------------------------------------------------------------
def _pick_tile(n, candidates):
    for c in candidates:
        if c <= n and n % c == 0:
            return c
    return n


def _bf16_exp_default():
    try:
        kind = jax.devices()[0].device_kind.lower()
    except Exception:
        return False
    return ("v6" in kind) or ("v7" in kind)


def danet_forward(x, wq, bq, wk, bk, wv, bv, gamma_p, gamma_c,
                  *, tq=None, tk=None, tk_cam=None):
    """x: (B, C, H, W) float32.  Returns (B, C, H, W)."""
    B, C, H, W = x.shape
    N = H * W

    xf = x.reshape(B, C, N).astype(jnp.float32)              # (B, C, N) f32
    xt_f32 = jnp.transpose(xf, (0, 2, 1))                    # (B, N, C) f32 (CAM)
    xt_bf16 = xt_f32.astype(jnp.bfloat16)                    # (B, N, C) bf16 (keys)
    # Value projection in (C, N) layout with the bias folded in.
    v_bf16 = (jnp.einsum('dc,bcn->bdn', wv, xf)
              + bv[None, :, None]).astype(jnp.bfloat16)      # (B, C, N) bf16

    # Fold the 1x1 q/k convs:
    #   energy'[i, j] = (Wk^T Wq x_i + Wk^T bq) . x_j   (row-constant terms
    #   of the true energy cancel in the softmax over j).
    m2t = jnp.dot(wk.T, wq).astype(jnp.bfloat16)             # (C, C)
    r = jnp.dot(wk.T, bq).reshape(C, 1).astype(jnp.float32)  # (C, 1)

    gamma_p = jnp.asarray(gamma_p, jnp.float32).reshape(1)
    gamma_c = jnp.asarray(gamma_c, jnp.float32).reshape(1)

    # ---- tile selection (larger tiles => less K/V re-streaming) ----------
    if tq is None:
        tq = _pick_tile(N, (1024, 512, 256, 128))
    if tk is None:
        tk = _pick_tile(N, (512, 256, 128))
    if tk_cam is None:
        tk_cam = _pick_tile(N, (2048, 1024, 512, 256, 128))

    # Keep the main kernel's VMEM footprint under ~36 MiB (v7x has only
    # 64 MiB physical; leave headroom for compiler temporaries).
    def _footprint(tq_, tk_):
        f32, bf16 = 4, 2
        return (2 * C * tq_ * f32            # x_q (double-buffered)
                + 2 * tk_ * C * bf16         # x^T key tiles
                + 2 * C * tk_ * bf16         # v key tiles
                + 4 * C * C * bf16           # attn + m2t
                + 2 * C * tq_ * f32          # out
                + C * tq_ * (bf16 + f32)     # qm + acc scratch
                + 2 * tk_ * tq_ * f32)       # e / p temporaries

    _BUDGET = 36 * 1024 * 1024
    while _footprint(tq, tk) > _BUDGET and tq > 128 and tq % 2 == 0:
        tq //= 2
    while _footprint(tq, tk) > _BUDGET and tk > 128 and tk % 2 == 0:
        tk //= 2
    # Guarantee >= 2 parallel grid slices for dual-TensorCore chips.
    if B * (N // tq) < 2 and tq % 2 == 0 and tq >= 256:
        tq //= 2

    # TODO(synk): pad + mask the key axis to support N not divisible by the
    # tile sizes (padded key lanes need -inf masking before the softmax).
    assert N % tq == 0 and N % tk == 0 and N % tk_cam == 0, (N, tq, tk, tk_cam)
    # TODO(synk): for production configs with C < 128, pad channels to 128 for
    # MXU / lane-density efficiency (test-size C is intentionally small).

    use_bf16_exp = _bf16_exp_default()

    # ---- kernel 1: channel-attention matrix, (B, C, C) bf16 --------------
    attn_c = pl.pallas_call(
        cam_attention_kernel,
        out_shape=jax.ShapeDtypeStruct((B, C, C), jnp.bfloat16),
        grid=(B, N // tk_cam),
        in_specs=[
            pl.BlockSpec((None, tk_cam, C), lambda b, k: (b, k, 0)),  # x^T tile
        ],
        out_specs=pl.BlockSpec((None, C, C), lambda b, k: (b, 0, 0)),
        scratch_shapes=[pltpu.VMEM((C, C), jnp.float32)],
        compiler_params=pltpu.CompilerParams(
            dimension_semantics=("parallel", "arbitrary"),
            vmem_limit_bytes=32 * 1024 * 1024),
    )(xt_f32)

    # ---- kernel 2: flash PAM + CAM apply + residuals, (B, C, N) ----------
    main_kernel = functools.partial(danet_main_kernel,
                                    use_bf16_exp=use_bf16_exp)
    out = pl.pallas_call(
        main_kernel,
        out_shape=jax.ShapeDtypeStruct((B, C, N), x.dtype),
        grid=(B, N // tq, N // tk),
        in_specs=[
            pl.BlockSpec((None, C, tq), lambda b, qi, kj: (b, 0, qi)),  # x q-tile (f32)
            pl.BlockSpec((None, tk, C), lambda b, qi, kj: (b, kj, 0)),  # x^T k-tile (bf16)
            pl.BlockSpec((None, C, tk), lambda b, qi, kj: (b, 0, kj)),  # v   k-tile (bf16)
            pl.BlockSpec((None, C, C), lambda b, qi, kj: (b, 0, 0)),    # channel attn
            pl.BlockSpec((C, C), lambda b, qi, kj: (0, 0)),             # M2^T = Wk^T Wq
            pl.BlockSpec((C, 1), lambda b, qi, kj: (0, 0)),             # r = Wk^T bq
            pl.BlockSpec(memory_space=pltpu.MemorySpace.SMEM),          # gamma_p
            pl.BlockSpec(memory_space=pltpu.MemorySpace.SMEM),          # gamma_c
        ],
        out_specs=pl.BlockSpec((None, C, tq), lambda b, qi, kj: (b, 0, qi)),
        scratch_shapes=[
            pltpu.VMEM((C, tq), jnp.bfloat16),    # qm (projected query tile)
            pltpu.VMEM((1, tq), jnp.float32),     # running max
            pltpu.VMEM((1, tq), jnp.float32),     # running sum
            pltpu.VMEM((C, tq), jnp.float32),     # PAM accumulator
        ],
        compiler_params=pltpu.CompilerParams(
            dimension_semantics=("parallel", "parallel", "arbitrary"),
            vmem_limit_bytes=40 * 1024 * 1024),
    )(xf, xt_bf16, v_bf16, attn_c, m2t, r, gamma_p, gamma_c)

    return out.reshape(B, C, H, W).astype(x.dtype)


# --------------------------------------------------------------------------
# Plain-JAX reference matching the PyTorch forward.
# --------------------------------------------------------------------------
def danet_reference(x, wq, bq, wk, bk, wv, bv, gamma_p, gamma_c):
    B, C, H, W = x.shape
    N = H * W
    xf = x.reshape(B, C, N).astype(jnp.float32)

    # CAM
    energy = jnp.einsum('bcn,bdn->bcd', xf, xf)
    energy_new = jnp.max(energy, axis=-1, keepdims=True) - energy
    attn_c = jax.nn.softmax(energy_new, axis=-1)
    cam = jnp.einsum('bcd,bdn->bcn', attn_c, xf)
    cam = gamma_c[0] * cam + xf

    # PAM
    q = jnp.einsum('oc,bcn->bon', wq, xf) + bq[None, :, None]
    k = jnp.einsum('oc,bcn->bon', wk, xf) + bk[None, :, None]
    v = jnp.einsum('oc,bcn->bon', wv, xf) + bv[None, :, None]
    energy_p = jnp.einsum('bci,bcj->bij', q, k)
    attn_p = jax.nn.softmax(energy_p, axis=-1)
    pam = jnp.einsum('bcj,bij->bci', v, attn_p)
    pam = gamma_p[0] * pam + xf

    return (cam + pam).reshape(B, C, H, W)


if __name__ == "__main__":
    B, C, H, W = 2, 16, 16, 16
    C8 = C // 8

    key = jax.random.PRNGKey(0)
    kx, kq, kbq, kk, kbk, kv, kbv = jax.random.split(key, 7)

    x = jax.random.normal(kx, (B, C, H, W), dtype=jnp.float32)

    # 1x1 conv parameters (Conv2d weight (out, in, 1, 1) stored as (out, in)).
    wq = jax.random.normal(kq, (C8, C), dtype=jnp.float32) * 0.1
    bq = jax.random.normal(kbq, (C8,), dtype=jnp.float32) * 0.1
    wk = jax.random.normal(kk, (C8, C), dtype=jnp.float32) * 0.1
    bk = jax.random.normal(kbk, (C8,), dtype=jnp.float32) * 0.1
    wv = jax.random.normal(kv, (C, C), dtype=jnp.float32) * 0.1
    bv = jax.random.normal(kbv, (C,), dtype=jnp.float32) * 0.1

    # PyTorch inits gamma to 0; use nonzero values so both attention branches
    # actually contribute and are numerically checked.
    gamma_p = jnp.array([0.5], dtype=jnp.float32)
    gamma_c = jnp.array([0.7], dtype=jnp.float32)

    out = danet_forward(x, wq, bq, wk, bk, wv, bv, gamma_p, gamma_c)
    out = jax.block_until_ready(out)

    ref = danet_reference(x, wq, bq, wk, bk, wv, bv, gamma_p, gamma_c)
    assert out.shape == (B, C, H, W)
    # bf16 MXU operands (f32 accumulation) -> slightly loosened tolerance.
    assert jnp.allclose(out, ref, atol=5e-2, rtol=5e-2), (
        float(jnp.max(jnp.abs(out - ref))))

    print("KERNEL_OK")
</pallas_src>

<mosaic_0001>
module attributes {stable_mosaic.version = 11 : i64} {
  func.func @cam_attention_kernel(%arg0: i32, %arg1: i32, %arg2: memref<1x256x16xf32, #tpu.memory_space<vmem>>, %arg3: memref<1x16x16xbf16, #tpu.memory_space<vmem>>, %arg4: memref<16x16xf32, #tpu.memory_space<vmem>>) attributes {dimension_semantics = [#tpu.dimension_semantics<parallel>, #tpu.dimension_semantics<arbitrary>], iteration_bounds = array<i64: 2, 1>, scalar_prefetch = 0 : i64, scratch_operands = 1 : i64, tpu.core_type = #tpu.core_type<tc>, window_params = [{transform_indices = @transform_0, window_bounds = array<i64: 1, 256, 16>}, {transform_indices = @transform_1, window_bounds = array<i64: 1, 16, 16>}]} {
    %c0_i32 = arith.constant 0 : i32
    %0 = arith.cmpi eq, %arg1, %c0_i32 : i32
    %1 = arith.extui %0 : i1 to i32
    %c0_i32_0 = arith.constant 0 : i32
    %2 = arith.cmpi ne, %1, %c0_i32_0 : i32
    scf.if %2 {
      %cst_9 = arith.constant 0.000000e+00 : f32
      %12 = vector.broadcast %cst_9 : f32 to vector<16x16xf32>
      %c0_10 = arith.constant 0 : index
      %c0_11 = arith.constant 0 : index
      %13 = vector.load %arg4[%c0_10, %c0_11] : memref<16x16xf32, #tpu.memory_space<vmem>>, vector<16x16xf32>
      tpu.vector_store %arg4[%c0_10, %c0_11], %12 {strides = array<i32>} : memref<16x16xf32, #tpu.memory_space<vmem>>, vector<16x16xf32>,
    } else {
    }
    %c0 = arith.constant 0 : index
    %c0_1 = arith.constant 0 : index
    %c0_2 = arith.constant 0 : index
    %3 = vector.load %arg2[%c0, %c0_1, %c0_2] : memref<1x256x16xf32, #tpu.memory_space<vmem>>, vector<1x256x16xf32>
    %4 = vector.shape_cast %3 : vector<1x256x16xf32> to vector<256x16xf32>
    %c0_3 = arith.constant 0 : index
    %c0_4 = arith.constant 0 : index
    %5 = vector.load %arg4[%c0_3, %c0_4] : memref<16x16xf32, #tpu.memory_space<vmem>>, vector<16x16xf32>
    %cst = arith.constant dense<0.000000e+00> : vector<16x16xf32>
    %6 = tpu.matmul %4, %4, %cst {dimension_numbers = #tpu.dot_dimension_numbers<[0], [0], [1], [1], [0, 1, 1, 1], [], []>} : vector<256x16xf32>, vector<256x16xf32>, vector<16x16xf32> -> vector<16x16xf32>
    %7 = arith.addf %5, %6 : vector<16x16xf32>
    %c0_5 = arith.constant 0 : index
    %c0_6 = arith.constant 0 : index
    %8 = vector.load %arg4[%c0_5, %c0_6] : memref<16x16xf32, #tpu.memory_space<vmem>>, vector<16x16xf32>
    tpu.vector_store %arg4[%c0_5, %c0_6], %7 {strides = array<i32>} : memref<16x16xf32, #tpu.memory_space<vmem>>, vector<16x16xf32>,
    %c0_i32_7 = arith.constant 0 : i32
    %9 = arith.cmpi eq, %arg1, %c0_i32_7 : i32
    %10 = arith.extui %9 : i1 to i32
    %c0_i32_8 = arith.constant 0 : i32
    %11 = arith.cmpi ne, %10, %c0_i32_8 : i32
    scf.if %11 {
      %c0_9 = arith.constant 0 : index
      %c0_10 = arith.constant 0 : index
      %12 = vector.load %arg4[%c0_9, %c0_10] : memref<16x16xf32, #tpu.memory_space<vmem>>, vector<16x16xf32>
      %cst_11 = arith.constant dense<0x7F800000> : vector<16xf32>
      %13 = vector.multi_reduction <minimumf>, %12, %cst_11 [1] : vector<16x16xf32> to vector<16xf32>
      %14 = vector.shape_cast %13 : vector<16xf32> to vector<16x1xf32>
      %15 = vector.broadcast %14 : vector<16x1xf32> to vector<16x16xf32>
      %16 = arith.subf %15, %12 : vector<16x16xf32>
      %17 = math.exp %16 : vector<16x16xf32>
      %cst_12 = arith.constant dense<0.000000e+00> : vector<16xf32>
      %18 = vector.multi_reduction <add>, %17, %cst_12 [1] : vector<16x16xf32> to vector<16xf32>
      %19 = vector.shape_cast %18 : vector<16xf32> to vector<16x1xf32>
      %20 = tpu.reciprocal %19 {approx = true} : vector<16x1xf32> -> vector<16x1xf32>
      %21 = vector.broadcast %20 : vector<16x1xf32> to vector<16x16xf32>
      %22 = arith.mulf %17, %21 : vector<16x16xf32>
      %23 = arith.truncf %22 : vector<16x16xf32> to vector<16x16xbf16>
      %c0_13 = arith.constant 0 : index
      %c0_14 = arith.constant 0 : index
      %c0_15 = arith.constant 0 : index
      %24 = vector.load %arg3[%c0_13, %c0_14, %c0_15] : memref<1x16x16xbf16, #tpu.memory_space<vmem>>, vector<1x16x16xbf16>
      %25 = vector.shape_cast %24 : vector<1x16x16xbf16> to vector<16x16xbf16>
      %26 = vector.shape_cast %23 : vector<16x16xbf16> to vector<1x16x16xbf16>
      tpu.vector_store %arg3[%c0_13, %c0_14, %c0_15], %26 {strides = array<i32>} : memref<1x16x16xbf16, #tpu.memory_space<vmem>>, vector<1x16x16xbf16>,
    } else {
    }
    return
  }
  func.func @transform_0(%arg0: i32, %arg1: i32) -> (i32, i32, i32) {
    %c0_i32 = arith.constant 0 : i32
    %c0_i32_0 = arith.constant 0 : i32
    return %arg0, %arg1, %c0_i32 : i32, i32, i32
  }
  func.func @transform_1(%arg0: i32, %arg1: i32) -> (i32, i32, i32) {
    %c0_i32 = arith.constant 0 : i32
    %c0_i32_0 = arith.constant 0 : i32
    %c0_i32_1 = arith.constant 0 : i32
    return %arg0, %c0_i32, %c0_i32_0 : i32, i32, i32
  }
}

</mosaic_0001>

<llo_original>
// kernel: tpu_custom_call.1
$region0: #{tpu_custom_call.1}
  #allocation0 [shape = 'u32[]', space=smem, size = 0x4, offset = 0x4, fixed_abs, tag = 'smem constant byte address 0x4 - core index']
  #allocation1 [shape = 'u32[144,128]{1,0:T(1,128)}', space=vmem, size = 0x12000, scoped, tag = 'internal scratch']
  #allocation2 [shape = 'f32[16,16]{1,0:T(8,128)}', space=vmem, size = 0x2000, scoped, tag = 'scratch operand']
  %s0 = inlined_call_operand.vmem [shape: f32[2,256,16], index: 0, kind: input, shape index: {}]
  %s1 = inlined_call_operand.hbm [shape: bf16[2,16,16], index: 1, kind: output, shape index: {}]
  %s2 = sld [smem:[#allocation0]]
  $region45: #{tpu_custom_call.1} parent=0
    _
  %s4 = ssub.s32 1, %s2
  %s5 = scalar_select 0, %s4, %s2
  $region1: #{tpu_custom_call.1} parent=0
    #allocation3 [shape = 'u8[8192]{0}', space=vmem, size = 0x2000, scoped, tag = 'output window, operand 0']
    #allocation4 [shape = 's32[2]{0}', space=sflag, size = 0x8, scoped, tag = 'scoped memory for tpu_custom_call.1']
    %6 = vsyncpa [#allocation4], 0
    %s7 = scalar_lea.sflag [#allocation4], 1
    %8 = vsyncpa %s7, 0
    loop: start=0, step=1, limit=4
    $region2: #{tpu_custom_call.1} parent=1 // loop_pre_header
      _
    $region3: #{tpu_custom_call.1} parent=1 // loop_header
      %s10 = sphi 0, %s14
      %p11 = scmp.ge.s32.totalorder %s10, 4
      %s17 = sphi 0, %s29
      %s18 = sphi 0, %s25
      %s19 = sphi 0, %s17
      %s20 = sphi 0, %s18
      %s21 = sphi 0, %s19
      %s22 = sphi 0, %s20
      %s34 = sphi 0, %s36
      %s37 = sphi 0, %s34
      %s38 = sphi 0, %s37
      %s54 = sphi 0, %s38
      %s60 = sphi 0, %s62
      %s63 = sphi 0, %s60
      %s64 = sphi 0, %s63
      %s80 = sphi 0, %s64
    $region4: #{tpu_custom_call.1} parent=1 // loop_header_branch
      %13 = sbr.rel (%p11) target = $region8
    $region5: #{tpu_custom_call.1} parent=1 // loop_body
      %s15 = ssub.s32 %s10, 1
      %s16 = ssub.s32 %s10, 2
      %s23 = sadd.s32 1, %s18
      %p24 = scmp.ge.s32.totalorder %s23, 1
      %s25 = scalar_select %p24, 0, %s23
      %s26 = sadd.s32 1, %s17
      %s27 = scalar_select %p24, %s26, %s17
      %p28 = scmp.ge.s32.totalorder %s27, 2
      %s29 = scalar_select %p28, 0, %s27
      %s30 = ssub.s32 %s17, %s29
      %s31 = ssub.s32 %s18, %s25
      %s32 = sor.u32 %s30, %s31
      %p33 = scmp.eq.s32.totalorder %s32, 0
      %s35 = sadd.s32 %s34, 1
      %s36 = scalar_select %p33, %s34, %s35
      %p39 = pneg %p33
      %p40 = scmp.eq.s32.totalorder %s10, 1
      %p41 = por %p39, %p40
      %p42 = scmp.ne.s32.totalorder %s34, %s37
      %p43 = scmp.eq.s32.totalorder %s10, 0
      %p44 = por %p42, %p43
      %p45 = scmp.ne.s32.totalorder %s34, %s37
      %p46 = scmp.eq.s32.totalorder %s15, 1
      %p47 = por %p45, %p46
      %p48 = scmp.ne.s32.totalorder %s37, %s38
      %p49 = scmp.eq.s32.totalorder %s15, 0
      %p50 = por %p48, %p49
      %p51 = scmp.ne.s32.totalorder %s37, %s38
      %p52 = scmp.eq.s32.totalorder %s16, 1
      %p53 = por %p51, %p52
      %p55 = scmp.ne.s32.totalorder %s38, %s54
      %p56 = scmp.eq.s32.totalorder %s16, 0
      %p57 = por %p55, %p56
      %s58 = ssub.s32 %s17, %s29
      %p59 = scmp.eq.s32.totalorder %s58, 0
      %s61 = sadd.s32 %s60, 1
      %s62 = scalar_select %p59, %s60, %s61
      %p65 = pneg %p59
      %p66 = scmp.eq.s32.totalorder %s10, 1
      %p67 = por %p65, %p66
      %p68 = scmp.ne.s32.totalorder %s60, %s63
      %p69 = scmp.eq.s32.totalorder %s10, 0
      %p70 = por %p68, %p69
      %p71 = scmp.ne.s32.totalorder %s60, %s63
      %p72 = scmp.eq.s32.totalorder %s15, 1
      %p73 = por %p71, %p72
      %p74 = scmp.ne.s32.totalorder %s63, %s64
      %p75 = scmp.eq.s32.totalorder %s15, 0
      %p76 = por %p74, %p75
      %p77 = scmp.ne.s32.totalorder %s63, %s64
      %p78 = scmp.eq.s32.totalorder %s16, 1
      %p79 = por %p77, %p78
      %p81 = scmp.ne.s32.totalorder %s64, %s80
      %p82 = scmp.eq.s32.totalorder %s16, 0
      %p83 = por %p81, %p82
      %p84 = scmp.le.s32.totalorder 1, %s10
      %p85 = scmp.lt.s32.totalorder %s10, 3
      %p86 = pnand %p84, %p85
      %p87 = pneg %p86
      // Predicated region
      $region9: #{tpu_custom_call.1} parent=5 // pred_check
        _
      $region10: #{tpu_custom_call.1} parent=5 // pred_check_branch
        %89 = sbr.rel (%p86) target = $region12
      $region11: #{tpu_custom_call.1} parent=5 // pred_region
        %s90 = ssub.s32 %s10, 1
      $region12: #{tpu_custom_call.1} parent=5 // pred_fallthru
        _
      %p91 = scmp.lt.s32.totalorder %s10, 2
      // Predicated region
      $region13: #{tpu_custom_call.1} parent=5 // pred_check
        %p92 = pneg %p91
      $region14: #{tpu_custom_call.1} parent=5 // pred_check_branch
        %94 = sbr.rel (%p92) target = $region16
      $region15: #{tpu_custom_call.1} parent=5 // pred_region
        // Predicated region
        $region17: #{tpu_custom_call.1} parent=15 // pred_check
          %p95 = pneg %p44
        $region18: #{tpu_custom_call.1} parent=15 // pred_check_branch
          %97 = sbr.rel (%p95) target = $region20
        $region19: #{tpu_custom_call.1} parent=15 // pred_region
          %s98 = smul.u32 32, %s18
          %p99 = scmp.lt.s32.totalorder %s17, 1
          %s100 = scalar_select %p99, %s17, 1
          %p101 = scmp.lt.s32.totalorder %s98, 31
          %s102 = scalar_select %p101, %s98, 31
          %s103 = smul.addr %s100, 32
          %s104 = sadd.s32 %s102, %s103
          %s105 = smul.addr %s104, 8
          %s106 = scalar_lea.vmem %s0, %s105
          %s107 = smul.u32 32, %s18
        $region20: #{tpu_custom_call.1} parent=15 // pred_fallthru
          _
      $region16: #{tpu_custom_call.1} parent=5 // pred_fallthru
        _
      %p108 = scmp.le.s32.totalorder 1, %s10
      %p109 = scmp.lt.s32.totalorder %s10, 3
      %p110 = pnand %p108, %p109
      %p111 = pneg %p110
      // Predicated region
      $region21: #{tpu_custom_call.1} parent=5 // pred_check
        _
      $region22: #{tpu_custom_call.1} parent=5 // pred_check_branch
        %113 = sbr.rel (%p110) target = $region24
      $region23: #{tpu_custom_call.1} parent=5 // pred_region
        %s114 = ssub.s32 %s10, 1
        %s115 = smul.u32 32, %s20
        %p116 = scmp.lt.s32.totalorder %s19, 1
        %s117 = scalar_select %p116, %s19, 1
        %p118 = scmp.lt.s32.totalorder %s115, 31
        %s119 = scalar_select %p118, %s115, 31
        %s120 = smul.addr %s117, 32
        %s121 = sadd.s32 %s119, %s120
        %s122 = smul.addr %s121, 8
        %s123 = scalar_lea.vmem %s0, %s122
        %p124 = pneg %p50
        %p125 = pneg %p47
        %p126 = pneg %p76
        %p127 = pneg %p73
        %s128 = sand.u32 %s63, 1
        %s129 = scalar_lea.sflag [#allocation4], %s128
        %s130 = sand.u32 %s63, 1
        %s131 = smul.addr %s130, 8
        %s132 = scalar_lea.vmem [#allocation3], %s131
        %s133 = smul.u32 32, %s20
        %p134 = scmp.lt.s32.totalorder %s19, 1
        %s135 = scalar_select %p134, %s19, 1
        %p136 = scmp.lt.s32.totalorder %s133, 31
        %s137 = scalar_select %p136, %s133, 31
        %s138 = smul.addr %s135, 32
        %s139 = sadd.s32 %s137, %s138
        %s140 = smul.addr %s139, 8
        %s141 = scalar_lea.vmem %s0, %s140
        %s142 = smul.u32 32, %s20
        %p143 = scmp.eq.s32.totalorder %s20, 0
        // Predicated region
        $region25: #{tpu_custom_call.1} parent=23 // pred_check
          %p144 = pneg %p143
        $region26: #{tpu_custom_call.1} parent=23 // pred_check_branch
          %146 = sbr.rel (%p144) target = $region28
        $region27: #{tpu_custom_call.1} parent=23 // pred_region
          %vm147 = vcmask 130048
          %148 = vst.msk [vmem:[#allocation2] sm:$0xff] %vm147, 0.0
          %149 = vst.msk [vmem:[#allocation2 + $0x8] sm:$0xff] %vm147, 0.0
        $region28: #{tpu_custom_call.1} parent=23 // pred_fallthru
          _
        %v150 = vld [vmem:[%s141] sm:$0xff]
        %v151 = vld [vmem:[%s141 + $0x8] sm:$0xff]
        %v152 = vld [vmem:[%s141 + $0x10] sm:$0xff]
        %v153 = vld [vmem:[%s141 + $0x18] sm:$0xff]
        %v154 = vld [vmem:[%s141 + $0x20] sm:$0xff]
        %v155 = vld [vmem:[%s141 + $0x28] sm:$0xff]
        %v156 = vld [vmem:[%s141 + $0x30] sm:$0xff]
        %v157 = vld [vmem:[%s141 + $0x38] sm:$0xff]
        %v158 = vld [vmem:[%s141 + $0x40] sm:$0xff]
        %v159 = vld [vmem:[%s141 + $0x48] sm:$0xff]
        %v160 = vld [vmem:[%s141 + $0x50] sm:$0xff]
        %v161 = vld [vmem:[%s141 + $0x58] sm:$0xff]
        %v162 = vld [vmem:[%s141 + $0x60] sm:$0xff]
        %v163 = vld [vmem:[%s141 + $0x68] sm:$0xff]
        %v164 = vld [vmem:[%s141 + $0x70] sm:$0xff]
        %v165 = vld [vmem:[%s141 + $0x78] sm:$0xff]
        %v166 = vld [vmem:[%s141 + $0x80] sm:$0xff]
        %v167 = vld [vmem:[%s141 + $0x88] sm:$0xff]
        %v168 = vld [vmem:[%s141 + $0x90] sm:$0xff]
        %v169 = vld [vmem:[%s141 + $0x98] sm:$0xff]
        %v170 = vld [vmem:[%s141 + $0xa0] sm:$0xff]
        %v171 = vld [vmem:[%s141 + $0xa8] sm:$0xff]
        %v172 = vld [vmem:[%s141 + $0xb0] sm:$0xff]
        %v173 = vld [vmem:[%s141 + $0xb8] sm:$0xff]
        %v174 = vld [vmem:[%s141 + $0xc0] sm:$0xff]
        %v175 = vld [vmem:[%s141 + $0xc8] sm:$0xff]
        %v176 = vld [vmem:[%s141 + $0xd0] sm:$0xff]
        %v177 = vld [vmem:[%s141 + $0xd8] sm:$0xff]
        %v178 = vld [vmem:[%s141 + $0xe0] sm:$0xff]
        %v179 = vld [vmem:[%s141 + $0xe8] sm:$0xff]
        %v180 = vld [vmem:[%s141 + $0xf0] sm:$0xff]
        %v181 = vld [vmem:[%s141 + $0xf8] sm:$0xff]
        %v182 = vld [vmem:[#allocation2] sm:$0xff]
        %v183 = vld [vmem:[#allocation2 + $0x8] sm:$0xff]
        %184 = vxpose.xlu0.b32.start [1/16] %v150, 128
        %185 = vxpose.xlu0.b32.cont [2/16] %v151, 128
        %186 = vxpose.xlu0.b32.cont [3/16] %v152, 128
        %187 = vxpose.xlu0.b32.cont [4/16] %v153, 128
        %188 = vxpose.xlu0.b32.cont [5/16] %v154, 128
        %189 = vxpose.xlu0.b32.cont [6/16] %v155, 128
        %190 = vxpose.xlu0.b32.cont [7/16] %v156, 128
        %191 = vxpose.xlu0.b32.cont [8/16] %v157, 128
        %192 = vxpose.xlu0.b32.cont [9/16] %v158, 128
        %193 = vxpose.xlu0.b32.cont [10/16] %v159, 128
        %194 = vxpose.xlu0.b32.cont [11/16] %v160, 128
        %195 = vxpose.xlu0.b32.cont [12/16] %v161, 128
        %196 = vxpose.xlu0.b32.cont [13/16] %v162, 128
        %197 = vxpose.xlu0.b32.cont [14/16] %v163, 128
        %198 = vxpose.xlu0.b32.cont [15/16] %v164, 128
        %199 = vxpose.xlu0.b32.end [16/16] %v165, 128
        %v200 = vpop.trf.xlu0
        %v201 = vpop.trf.xlu0
        %v202 = vpop.trf.xlu0
        %v203 = vpop.trf.xlu0
        %v204 = vpop.trf.xlu0
        %v205 = vpop.trf.xlu0
        %v206 = vpop.trf.xlu0
        %v207 = vpop.trf.xlu0
        %v208 = vpop.trf.xlu0
        %v209 = vpop.trf.xlu0
        %v210 = vpop.trf.xlu0
        %v211 = vpop.trf.xlu0
        %v212 = vpop.trf.xlu0
        %v213 = vpop.trf.xlu0
        %v214 = vpop.trf.xlu0
        %v215 = vpop.trf.xlu0
        %216 = vxpose.xlu0.b32.start [1/16] %v166, 128
        %217 = vxpose.xlu0.b32.cont [2/16] %v167, 128
        %218 = vxpose.xlu0.b32.cont [3/16] %v168, 128
        %219 = vxpose.xlu0.b32.cont [4/16] %v169, 128
        %220 = vxpose.xlu0.b32.cont [5/16] %v170, 128
        %221 = vxpose.xlu0.b32.cont [6/16] %v171, 128
        %222 = vxpose.xlu0.b32.cont [7/16] %v172, 128
        %223 = vxpose.xlu0.b32.cont [8/16] %v173, 128
        %224 = vxpose.xlu0.b32.cont [9/16] %v174, 128
        %225 = vxpose.xlu0.b32.cont [10/16] %v175, 128
        %226 = vxpose.xlu0.b32.cont [11/16] %v176, 128
        %227 = vxpose.xlu0.b32.cont [12/16] %v177, 128
        %228 = vxpose.xlu0.b32.cont [13/16] %v178, 128
        %229 = vxpose.xlu0.b32.cont [14/16] %v179, 128
        %230 = vxpose.xlu0.b32.cont [15/16] %v180, 128
        %231 = vxpose.xlu0.b32.end [16/16] %v181, 128
        %v232 = vpop.trf.xlu0
        %v233 = vpop.trf.xlu0
        %v234 = vpop.trf.xlu0
        %v235 = vpop.trf.xlu0
        %v236 = vpop.trf.xlu0
        %v237 = vpop.trf.xlu0
        %v238 = vpop.trf.xlu0
        %v239 = vpop.trf.xlu0
        %v240 = vpop.trf.xlu0
        %v241 = vpop.trf.xlu0
        %v242 = vpop.trf.xlu0
        %v243 = vpop.trf.xlu0
        %v244 = vpop.trf.xlu0
        %v245 = vpop.trf.xlu0
        %v246 = vpop.trf.xlu0
        %v247 = vpop.trf.xlu0
        %248 = vmatprep.subr.mxu0 0.0
        %249 = vmatpush1.msra.mxu0 %v150
        %250 = vmatprep.subr.mxu0 0.0
        %251 = vmatpush1.msra.mxu0 %v151
        %252 = vmatprep.subr.mxu0 0.0
        %253 = vmatpush1.msra.mxu0 %v152
        %254 = vmatprep.subr.mxu0 0.0
        %255 = vmatpush1.msra.mxu0 %v153
        %256 = vmatprep.subr.mxu0 0.0
        %257 = vmatpush1.msra.mxu0 %v154
        %258 = vmatprep.subr.mxu0 0.0
        %259 = vmatpush1.msra.mxu0 %v155
        %260 = vmatprep.subr.mxu0 0.0
        %261 = vmatpush1.msra.mxu0 %v156
        %262 = vmatprep.subr.mxu0 0.0
        %263 = vmatpush1.msra.mxu0 %v157
        %264 = vmatprep.subr.mxu0 0.0
        %265 = vmatpush1.msra.mxu0 %v158
        %266 = vmatprep.subr.mxu0 0.0
        %267 = vmatpush1.msra.mxu0 %v159
        %268 = vmatprep.subr.mxu0 0.0
        %269 = vmatpush1.msra.mxu0 %v160
        %270 = vmatprep.subr.mxu0 0.0
        %271 = vmatpush1.msra.mxu0 %v161
        %272 = vmatprep.subr.mxu0 0.0
        %273 = vmatpush1.msra.mxu0 %v162
        %274 = vmatprep.subr.mxu0 0.0
        %275 = vmatpush1.msra.mxu0 %v163
        %276 = vmatprep.subr.mxu0 0.0
        %277 = vmatpush1.msra.mxu0 %v164
        %278 = vmatprep.subr.mxu0 0.0
        %279 = vmatpush1.msra.mxu0 %v165
        %280 = vmatprep.subr.mxu0 0.0
        %281 = vmatpush1.msra.mxu0 %v166
        %282 = vmatprep.subr.mxu0 0.0
        %283 = vmatpush1.msra.mxu0 %v167
        %284 = vmatprep.subr.mxu0 0.0
        %285 = vmatpush1.msra.mxu0 %v168
        %286 = vmatprep.subr.mxu0 0.0
        %287 = vmatpush1.msra.mxu0 %v169
        %288 = vmatprep.subr.mxu0 0.0
        %289 = vmatpush1.msra.mxu0 %v170
        %290 = vmatprep.subr.mxu0 0.0
        %291 = vmatpush1.msra.mxu0 %v171
        %292 = vmatprep.subr.mxu0 0.0
        %293 = vmatpush1.msra.mxu0 %v172
        %294 = vmatprep.subr.mxu0 0.0
        %295 = vmatpush1.msra.mxu0 %v173
        %296 = vmatprep.subr.mxu0 0.0
        %297 = vmatpush1.msra.mxu0 %v174
        %298 = vmatprep.subr.mxu0 0.0
        %299 = vmatpush1.msra.mxu0 %v175
        %300 = vmatprep.subr.mxu0 0.0
        %301 = vmatpush1.msra.mxu0 %v176
        %302 = vmatprep.subr.mxu0 0.0
        %303 = vmatpush1.msra.mxu0 %v177
        %304 = vmatprep.subr.mxu0 0.0
        %305 = vmatpush1.msra.mxu0 %v178
        %306 = vmatprep.subr.mxu0 0.0
        %307 = vmatpush1.msra.mxu0 %v179
        %308 = vmatprep.subr.mxu0 0.0
        %309 = vmatpush1.msra.mxu0 %v180
        %310 = vmatprep.subr.mxu0 0.0
        %311 = vmatpush1.msra.mxu0 %v181
        %312 = vmatprep.mubr.f32.mxu0 %v232
        %313 = vmatmul.mubr.f32.gmra.mrb[0].mxu0 %v200
        %v314 = vpop.f32.mrb[0].mxu0
        %v315 = vadd.f32 0.0, %v314
        %v316 = vpop.f32.mrb[0].mxu0
        %317 = vmatprep.mubr.f32.mxu0 %v233
        %318 = vmatmul.mubr.f32.gmra.mrb[0].mxu0 %v201
        %v319 = vpop.f32.mrb[0].mxu0
        %v320 = vadd.f32 0.0, %v319
        %v321 = vpop.f32.mrb[0].mxu0
        %322 = vdwg.mxu0
        %v323 = vadd.f32 %v182, %v315
        %v324 = vadd.f32 %v183, %v320
        %vm325 = vcmask 130048
        %326 = vst.msk [vmem:[#allocation2] sm:$0xff] %vm325, %v323
        %327 = vst.msk [vmem:[#allocation2 + $0x8] sm:$0xff] %vm325, %v324
        // Predicated region
        $region29: #{tpu_custom_call.1} parent=23 // pred_check
          %p328 = pneg %p143
        $region30: #{tpu_custom_call.1} parent=23 // pred_check_branch
          %330 = sbr.rel (%p328) target = $region32
        $region31: #{tpu_custom_call.1} parent=23 // pred_region
          %v331 = vld [vmem:[#allocation2] sm:$0xff]
          %v332 = vld [vmem:[#allocation2 + $0x8] sm:$0xff]
          %v333 = vsel %vm325, %v331, inf
          %334 = vmin.xlane.f32.xlu0 %v333
          %v335 = vpop.xlane.xlu0 %334
          %v336 = vsel %vm325, %v332, inf
          %337 = vmin.xlane.f32.xlu0 %v336
          %v338 = vpop.xlane.xlu0 %337
          %v339 = vsub.f32 %v335, %v331
          %v340 = vsub.f32 %v338, %v332
          %v341 = vmul.f32 %v339, 1.442695
          %v342 = vpow.pop %v341
          %v343 = vmul.f32 %v340, 1.442695
          %v344 = vpow.pop %v343
          %v345 = vsel %vm325, %v342, 0.0
          %346 = vadd.xlane.f32.xlu0 %v345
          %v347 = vpop.xlane.xlu0 %346
          %v348 = vsel %vm325, %v344, 0.0
          %349 = vadd.xlane.f32.xlu0 %v348
          %v350 = vpop.xlane.xlu0 %349
          %v351 = vrcp.pop %v347
          %v352 = vrcp.pop %v350
          %v353 = vmul.f32 %v342, %v351
          %v354 = vmul.f32 %v344, %v352
          %v355 = vpack.c.bf16 %v354, %v353
          %v357 = vunpack.c.l.b16 %v355
          %v358 = vunpack.c.h.b16 %v355
          %v359 = vpack.c.b16 %v357, %v357
          %v360 = vpack.c.b16 %v358, %v358
          %vm363 = vcmask 125952
          %364 = vst.msk [vmem:[%s132] sm:$0xf] %vm363, %v359
          %365 = vst.msk [vmem:[%s132 + $0x4] sm:$0xf] %vm363, %v360
        $region32: #{tpu_custom_call.1} parent=23 // pred_fallthru
          _
        %s366 = sand.u32 %s63, 1
        %s367 = scalar_lea.sflag [#allocation4], %s366
        %s368 = sand.u32 %s63, 1
        %s369 = smul.addr %s368, 8
        %s370 = scalar_lea.vmem [#allocation3], %s369
        // Predicated region
        $region33: #{tpu_custom_call.1} parent=23 // pred_check
          %p371 = pneg %p73
        $region34: #{tpu_custom_call.1} parent=23 // pred_check_branch
          %373 = sbr.rel (%p371) target = $region36
        $region35: #{tpu_custom_call.1} parent=23 // pred_region
          %s375 = ssub.s32 128, 128
          %376 = vsyncadd %s367, %s375
          %s377 = smul.addr %s19, 2
          %s378 = smul.addr %s377, 64
          %s379 = scalar_lea.hbm %s1, %s378
          %s380 = sshll.u32 %s370, 4
          %s381 = int_to_ptr.vmem [resolvable:$true] %s380
          %386 = dma.vmem_to_hbm [thread:$0]  %s381, 128, %s379, %s367, 64, 64, 4
        $region36: #{tpu_custom_call.1} parent=23 // pred_fallthru
          _
      $region24: #{tpu_custom_call.1} parent=5 // pred_fallthru
        _
      %p387 = scmp.le.s32.totalorder 2, %s10
      // Predicated region
      $region37: #{tpu_custom_call.1} parent=5 // pred_check
        %p388 = pneg %p387
      $region38: #{tpu_custom_call.1} parent=5 // pred_check_branch
        %390 = sbr.rel (%p388) target = $region40
      $region39: #{tpu_custom_call.1} parent=5 // pred_region
        %s391 = ssub.s32 %s10, 2
        // Predicated region
        $region41: #{tpu_custom_call.1} parent=39 // pred_check
          %p392 = pneg %p79
        $region42: #{tpu_custom_call.1} parent=39 // pred_check_branch
          %394 = sbr.rel (%p392) target = $region44
        $region43: #{tpu_custom_call.1} parent=39 // pred_region
          %s395 = sand.u32 %s64, 1
          %s396 = scalar_lea.sflag [#allocation4], %s395
          %s397 = sand.u32 %s64, 1
          %s398 = smul.addr %s397, 8
          %s399 = scalar_lea.vmem [#allocation3], %s398
          %400 = dma.done %s396, 128
        $region44: #{tpu_custom_call.1} parent=39 // pred_fallthru
          _
      $region40: #{tpu_custom_call.1} parent=5 // pred_fallthru
        _
    $region6: #{tpu_custom_call.1} parent=1 // loop_footer
      %s14 = sadd.s32 1, %s10
    $region7: #{tpu_custom_call.1} parent=1 // loop_footer_branch
      %9 = sbr.rel target = $region3
    $region8: #{tpu_custom_call.1} parent=1 // loop_exit
      _
    %401 = vsyncpa [#allocation4], 1
    %s402 = scalar_lea.sflag [#allocation4], 1
    %403 = vsyncpa %s402, 1

</llo_original>
